<compile_context>
chip_gen: v7x
topology: tpu7x:2x2x1
jax: 0.10.0
libtpu: 0.0.40
codegen_flags: <defaults>
</compile_context>

<pallas_src>
import functools

import jax
import jax.numpy as jnp
from jax import lax
from jax.experimental import pallas as pl
from jax.experimental.pallas import tpu as pltpu

_LANES = 128                # lane width (fixed)
_SUB = 8                    # sublane alignment
_ACC_ROWS = 512             # fixed accumulator height (independent of block size)
_DEFAULT_BLOCK_ROWS = 4096  # rows per grid step (f32: 2 MiB per input per step)


def _iou_sums_kernel(x_ref, t_ref, o_ref, acc_int_ref, acc_tot_ref, *,
                     block_rows, total_rows, chunk_sizes, needs_mask):
    """Accumulates sum(x*t) and sum(x+t); emits lane-partial sums at the end."""
    i = pl.program_id(0)

    @pl.when(i == 0)
    def _():
        acc_int_ref[...] = jnp.zeros_like(acc_int_ref)
        acc_tot_ref[...] = jnp.zeros_like(acc_tot_ref)

    # Consume the block in fixed-size chunks so the accumulators do not scale
    # with the block size (VPU-only elementwise adds; no per-step XLU reduce).
    off = 0
    for cs in chunk_sizes:  # static, unrolled
        xs = x_ref[off:off + cs, :].astype(jnp.float32)
        ts = t_ref[off:off + cs, :].astype(jnp.float32)
        if needs_mask:
            # Last grid block may extend past the array; OOB contents are
            # unspecified, so mask invalid rows explicitly (jnp.where, not
            # multiply, in case the garbage is NaN/Inf).
            row = (i * block_rows + off
                   + lax.broadcasted_iota(jnp.int32, (cs, _LANES), 0))
            valid = row < total_rows
            xs = jnp.where(valid, xs, 0.0)
            ts = jnp.where(valid, ts, 0.0)
        acc_int_ref[0:cs, :] += xs * ts
        acc_tot_ref[0:cs, :] += xs + ts
        off += cs

    @pl.when(i == pl.num_programs(0) - 1)
    def _():
        # Single sublane reduce at the very end; the tiny 128-lane reduce is
        # finished in the wrapper.
        o_ref[0, :] = jnp.sum(acc_int_ref[...], axis=0)
        o_ref[1, :] = jnp.sum(acc_tot_ref[...], axis=0)


def binary_iou(inputs, targets, smooth=1.0, block_rows=_DEFAULT_BLOCK_ROWS):
    """IoU = (sum(x*t) + smooth) / (sum(x+t) - sum(x*t) + smooth)."""
    x = jnp.asarray(inputs).reshape(-1)   # copy-free for contiguous inputs
    t = jnp.asarray(targets).reshape(-1)
    assert x.shape == t.shape
    n = x.shape[0]

    # Only pad when n is not lane-aligned (<=127 zeros; zeros change neither
    # sum). The common lane-aligned case takes a copy-free reshape.
    rem = n % _LANES
    if rem:
        pad = _LANES - rem
        x = jnp.pad(x, (0, pad))
        t = jnp.pad(t, (0, pad))
        n += pad

    rows = n // _LANES
    x2 = x.reshape(rows, _LANES)
    t2 = t.reshape(rows, _LANES)

    # Block rows: large (amortize per-step overhead), multiple of 8, never
    # larger than the array (a full-extent block is always legal).
    if rows <= block_rows:
        br = rows
        num_blocks = 1
    else:
        br = max((block_rows // _SUB) * _SUB, _SUB)
        num_blocks = pl.cdiv(rows, br)

    needs_mask = (rows % br) != 0

    # Fixed-size accumulator; split the block into <=_ACC_ROWS-row chunks.
    acc_rows = min(_ACC_ROWS, br)
    chunk_sizes = []
    left = br
    while left > 0:
        c = min(acc_rows, left)
        chunk_sizes.append(c)
        left -= c
    chunk_sizes = tuple(chunk_sizes)

    kernel = functools.partial(
        _iou_sums_kernel,
        block_rows=br, total_rows=rows,
        chunk_sizes=chunk_sizes, needs_mask=needs_mask)

    # Scoped VMEM: double-buffered input blocks + accumulators + headroom
    # (v5e's default scoped limit is only 16 MiB).
    vmem_bytes = (2 * br * _LANES * (x2.dtype.itemsize + t2.dtype.itemsize)
                  + 2 * acc_rows * _LANES * 4 + (4 << 20))
    vmem_bytes = int(min(max(vmem_bytes, 32 << 20), 128 << 20))

    sums = pl.pallas_call(
        kernel,
        out_shape=jax.ShapeDtypeStruct((2, _LANES), jnp.float32),
        grid_spec=pltpu.PrefetchScalarGridSpec(
            num_scalar_prefetch=0,
            grid=(num_blocks,),
            in_specs=[
                pl.BlockSpec((br, _LANES), lambda i: (i, 0)),
                pl.BlockSpec((br, _LANES), lambda i: (i, 0)),
            ],
            out_specs=pl.BlockSpec((2, _LANES), lambda i: (0, 0)),
            scratch_shapes=[
                pltpu.VMEM((acc_rows, _LANES), jnp.float32),  # running x*t
                pltpu.VMEM((acc_rows, _LANES), jnp.float32),  # running x+t
            ],
        ),
        compiler_params=pltpu.CompilerParams(
            dimension_semantics=("arbitrary",),
            vmem_limit_bytes=vmem_bytes),
    )(x2, t2)

    intersection = jnp.sum(sums[0])
    total = jnp.sum(sums[1])
    union = total - intersection
    return (intersection + smooth) / (union + smooth)


def binary_iou_ref(inputs, targets, smooth=1.0):
    x = jnp.asarray(inputs, jnp.float32)
    t = jnp.asarray(targets, jnp.float32)
    intersection = jnp.sum(x * t)
    total = jnp.sum(x + t)
    union = total - intersection
    return (intersection + smooth) / (union + smooth)


if __name__ == "__main__":
    key = jax.random.PRNGKey(0)
    k1, k2, k3, k4 = jax.random.split(key, 4)

    # NCHW inputs as the PyTorch module would receive (sigmoid probabilities
    # vs. binary targets). BinaryIoU has no parameters to initialize.
    shape = (2, 4, 16, 16)
    inputs = jax.nn.sigmoid(jax.random.normal(k1, shape, jnp.float32))
    targets = (jax.random.uniform(k2, shape) > 0.5).astype(jnp.float32)

    iou = jax.block_until_ready(binary_iou(inputs, targets, smooth=1.0))
    ref = binary_iou_ref(inputs, targets, smooth=1.0)
    assert jnp.allclose(iou, ref, rtol=1e-5, atol=1e-5), (iou, ref)

    # Second check: exercises the multi-block path with a masked partial last
    # block (rows=25, block_rows=16 -> 2 grid steps, 9 valid rows in step 1).
    shape2 = (2, 4, 20, 20)
    inputs2 = jax.nn.sigmoid(jax.random.normal(k3, shape2, jnp.float32))
    targets2 = (jax.random.uniform(k4, shape2) > 0.5).astype(jnp.float32)
    iou2 = jax.block_until_ready(
        binary_iou(inputs2, targets2, smooth=1.0, block_rows=16))
    ref2 = binary_iou_ref(inputs2, targets2, smooth=1.0)
    assert jnp.allclose(iou2, ref2, rtol=1e-5, atol=1e-5), (iou2, ref2)

    # Third check: narrow-dtype inputs (kernel upcasts in-vreg; no wrapper cast).
    iou3 = jax.block_until_ready(
        binary_iou(inputs.astype(jnp.bfloat16), targets.astype(jnp.bfloat16)))
    ref3 = binary_iou_ref(inputs.astype(jnp.bfloat16),
                          targets.astype(jnp.bfloat16))
    assert jnp.allclose(iou3, ref3, rtol=1e-2, atol=1e-2), (iou3, ref3)

    print("KERNEL_OK")
</pallas_src>

<mosaic_0001>
module attributes {stable_mosaic.version = 11 : i64} {
  func.func @_iou_sums_kernel(%arg0: i32, %arg1: memref<16x128xf32, #tpu.memory_space<vmem>>, %arg2: memref<16x128xf32, #tpu.memory_space<vmem>>, %arg3: memref<2x128xf32, #tpu.memory_space<vmem>>, %arg4: memref<16x128xf32, #tpu.memory_space<vmem>>, %arg5: memref<16x128xf32, #tpu.memory_space<vmem>>) attributes {dimension_semantics = [#tpu.dimension_semantics<arbitrary>], iteration_bounds = array<i64: 1>, scalar_prefetch = 0 : i64, scratch_operands = 2 : i64, tpu.core_type = #tpu.core_type<tc>, window_params = [{transform_indices = @transform_0, window_bounds = array<i64: 16, 128>}, {transform_indices = @transform_1, window_bounds = array<i64: 16, 128>}, {pipeline_mode = #tpu.pipeline_mode<synchronous>, transform_indices = @transform_2, window_bounds = array<i64: 2, 128>}]} {
    %c0_i32 = arith.constant 0 : i32
    %0 = arith.cmpi eq, %arg0, %c0_i32 : i32
    %1 = arith.extui %0 : i1 to i32
    %c0_i32_0 = arith.constant 0 : i32
    %2 = arith.cmpi ne, %1, %c0_i32_0 : i32
    scf.if %2 {
      %cst = arith.constant 0.000000e+00 : f32
      %16 = vector.broadcast %cst : f32 to vector<16x128xf32>
      %c0_14 = arith.constant 0 : index
      %c0_15 = arith.constant 0 : index
      %17 = vector.load %arg4[%c0_14, %c0_15] : memref<16x128xf32, #tpu.memory_space<vmem>>, vector<16x128xf32>
      tpu.vector_store %arg4[%c0_14, %c0_15], %16 {strides = array<i32>} : memref<16x128xf32, #tpu.memory_space<vmem>>, vector<16x128xf32>,
      %cst_16 = arith.constant 0.000000e+00 : f32
      %18 = vector.broadcast %cst_16 : f32 to vector<16x128xf32>
      %c0_17 = arith.constant 0 : index
      %c0_18 = arith.constant 0 : index
      %19 = vector.load %arg5[%c0_17, %c0_18] : memref<16x128xf32, #tpu.memory_space<vmem>>, vector<16x128xf32>
      tpu.vector_store %arg5[%c0_17, %c0_18], %18 {strides = array<i32>} : memref<16x128xf32, #tpu.memory_space<vmem>>, vector<16x128xf32>,
    } else {
    }
    %c0 = arith.constant 0 : index
    %c0_1 = arith.constant 0 : index
    %3 = vector.load %arg1[%c0, %c0_1] : memref<16x128xf32, #tpu.memory_space<vmem>>, vector<16x128xf32>
    %c0_2 = arith.constant 0 : index
    %c0_3 = arith.constant 0 : index
    %4 = vector.load %arg2[%c0_2, %c0_3] : memref<16x128xf32, #tpu.memory_space<vmem>>, vector<16x128xf32>
    %c0_4 = arith.constant 0 : index
    %c0_5 = arith.constant 0 : index
    %5 = vector.load %arg4[%c0_4, %c0_5] : memref<16x128xf32, #tpu.memory_space<vmem>>, vector<16x128xf32>
    %6 = arith.mulf %3, %4 : vector<16x128xf32>
    %7 = arith.addf %5, %6 : vector<16x128xf32>
    %c0_6 = arith.constant 0 : index
    %c0_7 = arith.constant 0 : index
    %8 = vector.load %arg4[%c0_6, %c0_7] : memref<16x128xf32, #tpu.memory_space<vmem>>, vector<16x128xf32>
    tpu.vector_store %arg4[%c0_6, %c0_7], %7 {strides = array<i32>} : memref<16x128xf32, #tpu.memory_space<vmem>>, vector<16x128xf32>,
    %c0_8 = arith.constant 0 : index
    %c0_9 = arith.constant 0 : index
    %9 = vector.load %arg5[%c0_8, %c0_9] : memref<16x128xf32, #tpu.memory_space<vmem>>, vector<16x128xf32>
    %10 = arith.addf %3, %4 : vector<16x128xf32>
    %11 = arith.addf %9, %10 : vector<16x128xf32>
    %c0_10 = arith.constant 0 : index
    %c0_11 = arith.constant 0 : index
    %12 = vector.load %arg5[%c0_10, %c0_11] : memref<16x128xf32, #tpu.memory_space<vmem>>, vector<16x128xf32>
    tpu.vector_store %arg5[%c0_10, %c0_11], %11 {strides = array<i32>} : memref<16x128xf32, #tpu.memory_space<vmem>>, vector<16x128xf32>,
    %c0_i32_12 = arith.constant 0 : i32
    %13 = arith.cmpi eq, %arg0, %c0_i32_12 : i32
    %14 = arith.extui %13 : i1 to i32
    %c0_i32_13 = arith.constant 0 : i32
    %15 = arith.cmpi ne, %14, %c0_i32_13 : i32
    scf.if %15 {
      %c0_14 = arith.constant 0 : index
      %c0_15 = arith.constant 0 : index
      %16 = vector.load %arg4[%c0_14, %c0_15] : memref<16x128xf32, #tpu.memory_space<vmem>>, vector<16x128xf32>
      %cst = arith.constant dense<0.000000e+00> : vector<128xf32>
      %17 = vector.multi_reduction <add>, %16, %cst [0] : vector<16x128xf32> to vector<128xf32>
      %c0_16 = arith.constant 0 : index
      %c0_17 = arith.constant 0 : index
      %18 = vector.load %arg3[%c0_16, %c0_17] : memref<2x128xf32, #tpu.memory_space<vmem>>, vector<1x128xf32>
      %19 = vector.shape_cast %18 : vector<1x128xf32> to vector<128xf32>
      %20 = vector.shape_cast %17 : vector<128xf32> to vector<1x128xf32>
      tpu.vector_store %arg3[%c0_16, %c0_17], %20 {strides = array<i32>} : memref<2x128xf32, #tpu.memory_space<vmem>>, vector<1x128xf32>,
      %c0_18 = arith.constant 0 : index
      %c0_19 = arith.constant 0 : index
      %21 = vector.load %arg5[%c0_18, %c0_19] : memref<16x128xf32, #tpu.memory_space<vmem>>, vector<16x128xf32>
      %cst_20 = arith.constant dense<0.000000e+00> : vector<128xf32>
      %22 = vector.multi_reduction <add>, %21, %cst_20 [0] : vector<16x128xf32> to vector<128xf32>
      %c1 = arith.constant 1 : index
      %c0_21 = arith.constant 0 : index
      %23 = vector.load %arg3[%c1, %c0_21] : memref<2x128xf32, #tpu.memory_space<vmem>>, vector<1x128xf32>
      %24 = vector.shape_cast %23 : vector<1x128xf32> to vector<128xf32>
      %25 = vector.shape_cast %22 : vector<128xf32> to vector<1x128xf32>
      tpu.vector_store %arg3[%c1, %c0_21], %25 {strides = array<i32>} : memref<2x128xf32, #tpu.memory_space<vmem>>, vector<1x128xf32>,
    } else {
    }
    return
  }
  func.func @transform_0(%arg0: i32) -> (i32, i32) {
    %c0_i32 = arith.constant 0 : i32
    %c0_i32_0 = arith.constant 0 : i32
    return %arg0, %c0_i32 : i32, i32
  }
  func.func @transform_1(%arg0: i32) -> (i32, i32) {
    %c0_i32 = arith.constant 0 : i32
    %c0_i32_0 = arith.constant 0 : i32
    return %arg0, %c0_i32 : i32, i32
  }
  func.func @transform_2(%arg0: i32) -> (i32, i32) {
    %c0_i32 = arith.constant 0 : i32
    %c0_i32_0 = arith.constant 0 : i32
    %c0_i32_1 = arith.constant 0 : i32
    return %c0_i32, %c0_i32_0 : i32, i32
  }
}

</mosaic_0001>

<llo_original>
// kernel: tpu_custom_call.1
$region0: #{tpu_custom_call.1}
  #allocation0 [shape = 'u32[]', space=smem, size = 0x4, offset = 0x4, fixed_abs, tag = 'smem constant byte address 0x4 - core index']
  #allocation1 [shape = 'u32[144,128]{1,0:T(1,128)}', space=vmem, size = 0x12000, scoped, tag = 'internal scratch']
  #allocation2 [shape = 'f32[16,128]{1,0:T(8,128)}', space=vmem, size = 0x2000, scoped, tag = 'scratch operand']
  #allocation3 [shape = 'f32[16,128]{1,0:T(8,128)}', space=vmem, size = 0x2000, scoped, tag = 'scratch operand']
  %s0 = inlined_call_operand.hbm [shape: f32[16,128], index: 0, kind: input, shape index: {}]
  %s1 = inlined_call_operand.hbm [shape: f32[16,128], index: 1, kind: input, shape index: {}]
  %s2 = inlined_call_operand.hbm [shape: f32[2,128], index: 2, kind: output, shape index: {}]
  %s3 = sld [smem:[#allocation0]]
  $region34: #{tpu_custom_call.1} parent=0
    _
  %s5 = ssub.s32 1, %s3
  %s6 = scalar_select 0, %s5, %s3
  $region1: #{tpu_custom_call.1} parent=0
    #allocation4 [shape = 'u8[8192]{0}', space=vmem, size = 0x2000, scoped, tag = 'input window, operand 0, single buffered']
    #allocation5 [shape = 's32[1]{0}', space=sflag, size = 0x4, scoped, tag = 'scoped memory for tpu_custom_call.1']
    #allocation6 [shape = 's32[1]{0}', space=sflag, size = 0x4, scoped, tag = 'scoped memory for tpu_custom_call.1']
    #allocation7 [shape = 'u8[8192]{0}', space=vmem, size = 0x2000, scoped, tag = 'input window, operand 1, single buffered']
    #allocation8 [shape = 's32[1]{0}', space=sflag, size = 0x4, scoped, tag = 'scoped memory for tpu_custom_call.1']
    #allocation9 [shape = 'u8[1024]{0}', space=vmem, size = 0x400, scoped, tag = 'output window, operand 0, single buffered']
    %7 = vsyncpa [#allocation5], 0
    %8 = vsyncpa [#allocation8], 0
    %9 = vsyncpa [#allocation6], 0
    // Predicated region
    $region2: #{tpu_custom_call.1} parent=1 // pred_check
      _
    $region3: #{tpu_custom_call.1} parent=1 // pred_check_branch
      %11 = sbr.rel (0) target = $region5
    $region4: #{tpu_custom_call.1} parent=1 // pred_region
      %s13 = ssub.s32 256, 256
      %14 = vsyncadd [#allocation5], %s13
      %s15 = sshll.u32 [#allocation4], 4
      %s16 = int_to_ptr.vmem [resolvable:$true] %s15
      %21 = dma.hbm_to_vmem [thread:$0]  %s0, 256, %s16, [#allocation5], 128, 128, 8
    $region5: #{tpu_custom_call.1} parent=1 // pred_fallthru
      _
    // Predicated region
    $region6: #{tpu_custom_call.1} parent=1 // pred_check
      _
    $region7: #{tpu_custom_call.1} parent=1 // pred_check_branch
      %23 = sbr.rel (0) target = $region9
    $region8: #{tpu_custom_call.1} parent=1 // pred_region
      %s25 = ssub.s32 256, 256
      %26 = vsyncadd [#allocation8], %s25
      %s27 = sshll.u32 [#allocation7], 4
      %s28 = int_to_ptr.vmem [resolvable:$true] %s27
      %33 = dma.hbm_to_vmem [thread:$0]  %s1, 256, %s28, [#allocation8], 128, 128, 8
    $region9: #{tpu_custom_call.1} parent=1 // pred_fallthru
      _
    // Predicated region
    $region10: #{tpu_custom_call.1} parent=1 // pred_check
      _
    $region11: #{tpu_custom_call.1} parent=1 // pred_check_branch
      %35 = sbr.rel (0) target = $region13
    $region12: #{tpu_custom_call.1} parent=1 // pred_region
      %36 = dma.done [#allocation5], 256
    $region13: #{tpu_custom_call.1} parent=1 // pred_fallthru
      _
    // Predicated region
    $region14: #{tpu_custom_call.1} parent=1 // pred_check
      _
    $region15: #{tpu_custom_call.1} parent=1 // pred_check_branch
      %38 = sbr.rel (0) target = $region17
    $region16: #{tpu_custom_call.1} parent=1 // pred_region
      %39 = dma.done [#allocation8], 256
    $region17: #{tpu_custom_call.1} parent=1 // pred_fallthru
      _
    %p40 = scmp.eq.s32.totalorder 0, 0
    // Predicated region
    $region18: #{tpu_custom_call.1} parent=1 // pred_check
      %p41 = pneg %p40
    $region19: #{tpu_custom_call.1} parent=1 // pred_check_branch
      %43 = sbr.rel (%p41) target = $region21
    $region20: #{tpu_custom_call.1} parent=1 // pred_region
      %44 = vst [vmem:[#allocation2] sm:$0xff] 0.0
      %45 = vst [vmem:[#allocation2 + $0x8] sm:$0xff] 0.0
      %46 = vst [vmem:[#allocation3] sm:$0xff] 0.0
      %47 = vst [vmem:[#allocation3 + $0x8] sm:$0xff] 0.0
    $region21: #{tpu_custom_call.1} parent=1 // pred_fallthru
      _
    %v48 = vld [vmem:[#allocation4] sm:$0xff]
    %v49 = vld [vmem:[#allocation4 + $0x8] sm:$0xff]
    %v50 = vld [vmem:[#allocation7] sm:$0xff]
    %v51 = vld [vmem:[#allocation7 + $0x8] sm:$0xff]
    %v52 = vld [vmem:[#allocation2] sm:$0xff]
    %v53 = vld [vmem:[#allocation2 + $0x8] sm:$0xff]
    %v54 = vmul.f32 %v48, %v50
    %v55 = vmul.f32 %v49, %v51
    %v56 = vadd.f32 %v52, %v54
    %v57 = vadd.f32 %v53, %v55
    %58 = vst [vmem:[#allocation2] sm:$0xff] %v56
    %59 = vst [vmem:[#allocation2 + $0x8] sm:$0xff] %v57
    %v60 = vld [vmem:[#allocation3] sm:$0xff]
    %v61 = vld [vmem:[#allocation3 + $0x8] sm:$0xff]
    %v62 = vadd.f32 %v48, %v50
    %v63 = vadd.f32 %v49, %v51
    %v64 = vadd.f32 %v60, %v62
    %v65 = vadd.f32 %v61, %v63
    %66 = vst [vmem:[#allocation3] sm:$0xff] %v64
    %67 = vst [vmem:[#allocation3 + $0x8] sm:$0xff] %v65
    // Predicated region
    $region22: #{tpu_custom_call.1} parent=1 // pred_check
      %p68 = pneg %p40
    $region23: #{tpu_custom_call.1} parent=1 // pred_check_branch
      %70 = sbr.rel (%p68) target = $region25
    $region24: #{tpu_custom_call.1} parent=1 // pred_region
      %v71 = vld [vmem:[#allocation2] sm:$0xff]
      %v72 = vld [vmem:[#allocation2 + $0x8] sm:$0xff]
      %v73 = vadd.f32 %v71, %v72
      %v74 = vrot.slane %v73, 4
      %v75 = vadd.f32 %v73, %v74
      %v76 = vrot.slane %v75, 2
      %v77 = vadd.f32 %v75, %v76
      %v78 = vrot.slane %v77, 1
      %v79 = vadd.f32 %v77, %v78
      %80 = vst [vmem:[#allocation9] sm:$0x1] %v79
      %v81 = vld [vmem:[#allocation3] sm:$0xff]
      %v82 = vld [vmem:[#allocation3 + $0x8] sm:$0xff]
      %v83 = vadd.f32 %v81, %v82
      %v84 = vrot.slane %v83, 4
      %v85 = vadd.f32 %v83, %v84
      %v86 = vrot.slane %v85, 2
      %v87 = vadd.f32 %v85, %v86
      %v88 = vrot.slane %v87, 1
      %v89 = vadd.f32 %v87, %v88
      %90 = vst [vmem:[#allocation9 + $0x1] sm:$0x1] %v89
    $region25: #{tpu_custom_call.1} parent=1 // pred_fallthru
      _
    // Predicated region
    $region26: #{tpu_custom_call.1} parent=1 // pred_check
      _
    $region27: #{tpu_custom_call.1} parent=1 // pred_check_branch
      %92 = sbr.rel (0) target = $region29
    $region28: #{tpu_custom_call.1} parent=1 // pred_region
      %s94 = ssub.s32 32, 32
      %95 = vsyncadd [#allocation6], %s94
      %s97 = sshll.u32 [#allocation9], 4
      %s98 = int_to_ptr.vmem [resolvable:$true] %s97
      %100 = dma.vmem_to_hbm [thread:$0]  %s98, 32, %s2, [#allocation6]
    $region29: #{tpu_custom_call.1} parent=1 // pred_fallthru
      _
    // Predicated region
    $region30: #{tpu_custom_call.1} parent=1 // pred_check
      _
    $region31: #{tpu_custom_call.1} parent=1 // pred_check_branch
      %102 = sbr.rel (0) target = $region33
    $region32: #{tpu_custom_call.1} parent=1 // pred_region
      %103 = dma.done [#allocation6], 32
    $region33: #{tpu_custom_call.1} parent=1 // pred_fallthru
      _
    %104 = vsyncpa [#allocation5], 1
    %105 = vsyncpa [#allocation8], 1
    %106 = vsyncpa [#allocation6], 1

</llo_original>
